<compile_context>
chip_gen: v6e
topology: v6e:2x2x1
jax: 0.10.0
libtpu: 0.0.40
codegen_flags: <defaults>
</compile_context>

<pallas_src>
import functools

import jax
import jax.numpy as jnp
import numpy as np
from jax import lax
from jax.experimental import pallas as pl
from jax.experimental.pallas import tpu as pltpu

EPS = 1e-5


# ------------------------- Pallas kernels -------------------------

def gram_stats_kernel(x_ref, g_ref, s_ref, *, t_per, t_valid):
    """Pass 1 (tiled): accumulate G += x_tile @ x_tile^T and s += rowsum(x_tile).

    Grid is (P, N, T_per): P = per-core split of the pixel-tile axis (megacore),
    N = batch, T_per = pixel tiles per core.  The last axis is the reduction; the
    (P*N) partial outputs are summed in plain JAX afterwards.
    """
    i = pl.program_id(2)

    @pl.when(i == 0)
    def _():
        g_ref[...] = jnp.zeros_like(g_ref)
        s_ref[...] = jnp.zeros_like(s_ref)

    # Tail guard: with T_per = cdiv(T, P) the last core may see a phantom tile.
    g_idx = pl.program_id(0) * t_per + i

    @pl.when(g_idx < t_valid)
    def _():
        x = x_ref[0]                                            # (Cin, THW)
        g_ref[...] += lax.dot_general(
            x, x, (((1,), (1,)), ((), ())),
            preferred_element_type=jnp.float32)[None]           # (1, Cin, Cin)
        s_ref[...] += jnp.sum(x, axis=1, keepdims=True)[None]   # (1, Cin, 1)


def conv_bn_relu_kernel(x_ref, w2_ref, b2_ref, o_ref):
    """Pass 2 (tiled): fused conv + BN affine + ReLU:  o = max(W2 @ x + b2, 0)."""
    z = jnp.dot(w2_ref[...], x_ref[0], preferred_element_type=jnp.float32)
    o_ref[...] = jnp.maximum(z + b2_ref[...], 0.0)[None]


def conv_kernel(x_ref, w_ref, o_ref):
    """Plain 1x1 conv on the small spatial grid (upsample path): z = W @ x."""
    o_ref[...] = jnp.dot(w_ref[...], x_ref[0],
                         preferred_element_type=jnp.float32)[None]


def upsample_affine_relu_kernel(z_ref, k_ref, sc_ref, sh_ref, o_ref):
    """Upsample pass 2: out = ReLU((scale*z + shift) @ K) per batch.

    K is the (HW, 4HW) Kronecker bilinear-x2 operator; its columns sum to 1, so the
    per-channel affine commutes through it and is applied on the cheap (small) side.
    """
    zs = sc_ref[...] * z_ref[0] + sh_ref[...]                           # (Cout, HW)
    up = jnp.dot(zs, k_ref[...], preferred_element_type=jnp.float32)    # (Cout, 4HW)
    o_ref[...] = jnp.maximum(up, 0.0)[None]


def fused_small_kernel(x_ref, w_ref, gm_ref, bt_ref, o_ref, *, eps):
    """Single-call fused path (whole problem resident in VMEM): x is read from HBM once.

    Phase 1: per-batch Gram + row-sum stats; phase 2: BN fold + conv + affine + ReLU.
    """
    n_batch, c_in, hw = x_ref.shape
    w = w_ref[...]                                                      # (Cout, Cin)

    def stat_body(n, carry):
        g, s = carry
        xn = x_ref[n]                                                   # (Cin, HW)
        g = g + lax.dot_general(xn, xn, (((1,), (1,)), ((), ())),
                                preferred_element_type=jnp.float32)
        s = s + jnp.sum(xn, axis=1, keepdims=True)
        return g, s

    g, s = lax.fori_loop(
        0, n_batch, stat_body,
        (jnp.zeros((c_in, c_in), jnp.float32),
         jnp.zeros((c_in, 1), jnp.float32)))

    m = float(n_batch * hw)
    mean = jnp.dot(w, s, preferred_element_type=jnp.float32) / m         # (Cout, 1)
    sumsq = jnp.sum(jnp.dot(w, g, preferred_element_type=jnp.float32) * w,
                    axis=1, keepdims=True)                               # (Cout, 1)
    var = jnp.maximum(sumsq / m - mean * mean, 0.0)
    scale = gm_ref[...] * lax.rsqrt(var + eps)
    w2 = scale * w
    b2 = bt_ref[...] - mean * scale

    @pl.loop(0, n_batch)
    def _(n):
        zn = jnp.dot(w2, x_ref[n], preferred_element_type=jnp.float32)
        o_ref[n] = jnp.maximum(zn + b2, 0.0)


# ------------------------- small helpers -------------------------

def _choose_thw(hw, c_in, c_out):
    """Pick the lane tile: a multiple of 128 that exactly divides H*W (or the full H*W),
    as large as possible while keeping double-buffered x/out tiles ~<= 24 MiB and
    <= 2048 lanes (v7x's 64 MiB VMEM budget)."""
    budget = 24 << 20
    per_lane = 8 * (c_in + c_out)           # f32, double-buffered x + out columns
    max_tm = max(128, budget // max(per_lane, 1))
    max_tm = min(max_tm, 2048)
    if hw <= max_tm or hw % 128 != 0:
        return hw                            # full width is always a legal block
    best = 128
    d = 256
    while d <= max_tm:
        if hw % d == 0:
            best = d
        d += 128
    return best


def _vmem_limit(need_bytes):
    """Explicit scoped-VMEM limit: above v5e's 16 MiB default, under v7x's 64 MiB physical."""
    return int(min(max(need_bytes + (4 << 20), 32 << 20), 48 << 20))


def _fold_bn(w, gram, rowsum, m, gamma, beta):
    """Fold training-mode BN (batch stats of the bias-free conv output) into the conv."""
    sum_z = jnp.dot(w, rowsum)[:, 0]                       # (Cout,)
    sumsq_z = jnp.sum(jnp.dot(w, gram) * w, axis=1)        # (Cout,)
    mean = sum_z / m
    var = jnp.maximum(sumsq_z / m - mean * mean, 0.0)
    scale = gamma * lax.rsqrt(var + EPS)
    w2 = scale[:, None] * w
    b2 = (beta - mean * scale)[:, None]
    return w2, b2


def _bilinear_matrix(n_in, n_out, dtype=jnp.float32):
    """align_corners=True bilinear interpolation matrix (n_out, n_in)."""
    if n_in == 1:
        return jnp.ones((n_out, 1), dtype)
    src = jnp.arange(n_out, dtype=jnp.float32) * (n_in - 1) / (n_out - 1)
    lo = jnp.clip(jnp.floor(src).astype(jnp.int32), 0, n_in - 2)
    frac = src - lo.astype(jnp.float32)
    a = jnp.zeros((n_out, n_in), dtype)
    rows = jnp.arange(n_out)
    a = a.at[rows, lo].add(1.0 - frac)
    a = a.at[rows, lo + 1].add(frac)
    return a


# ------------------------- forward paths -------------------------

def _decode_plain_fused(x3, w, gamma, beta):
    n, c_in, hw = x3.shape
    c_out = w.shape[0]
    return pl.pallas_call(
        functools.partial(fused_small_kernel, eps=EPS),
        out_shape=jax.ShapeDtypeStruct((n, c_out, hw), jnp.float32),
        grid_spec=pltpu.PrefetchScalarGridSpec(
            num_scalar_prefetch=0,
            grid=(1,),
            in_specs=[
                pl.BlockSpec((n, c_in, hw), lambda i: (0, 0, 0)),
                pl.BlockSpec((c_out, c_in), lambda i: (0, 0)),
                pl.BlockSpec((c_out, 1), lambda i: (0, 0)),
                pl.BlockSpec((c_out, 1), lambda i: (0, 0)),
            ],
            out_specs=pl.BlockSpec((n, c_out, hw), lambda i: (0, 0, 0))),
        compiler_params=pltpu.CompilerParams(
            dimension_semantics=("arbitrary",),
            vmem_limit_bytes=_vmem_limit(8 * n * (c_in + c_out) * hw)),
    )(x3, w, gamma.reshape(c_out, 1), beta.reshape(c_out, 1))


def _decode_plain_tiled(x3, w, gamma, beta):
    n, c_in, hw = x3.shape
    c_out = w.shape[0]
    thw = _choose_thw(hw, c_in, c_out)
    t = hw // thw                                   # thw divides hw exactly
    # Megacore: batch axis is "parallel"; when batch==1 also split the pixel tiles 2-way
    # (robust to odd tile counts via the in-kernel tail guard).
    p = 2 if (n == 1 and t >= 2) else 1
    t_per = pl.cdiv(t, p)

    vmem1 = _vmem_limit(8 * c_in * thw + 16 * c_in * (c_in + 1))
    g_part, s_part = pl.pallas_call(
        functools.partial(gram_stats_kernel, t_per=t_per, t_valid=t),
        out_shape=(jax.ShapeDtypeStruct((p * n, c_in, c_in), jnp.float32),
                   jax.ShapeDtypeStruct((p * n, c_in, 1), jnp.float32)),
        grid_spec=pltpu.PrefetchScalarGridSpec(
            num_scalar_prefetch=0,
            grid=(p, n, t_per),
            in_specs=[pl.BlockSpec(
                (1, c_in, thw),
                lambda pi, ni, i: (ni, 0, jnp.minimum(pi * t_per + i, t - 1)))],
            out_specs=[
                pl.BlockSpec((1, c_in, c_in), lambda pi, ni, i: (pi * n + ni, 0, 0)),
                pl.BlockSpec((1, c_in, 1), lambda pi, ni, i: (pi * n + ni, 0, 0)),
            ]),
        compiler_params=pltpu.CompilerParams(
            dimension_semantics=("parallel", "parallel", "arbitrary"),
            vmem_limit_bytes=vmem1),
    )(x3)

    gram = jnp.sum(g_part, axis=0)
    rowsum = jnp.sum(s_part, axis=0)
    w2, b2 = _fold_bn(w, gram, rowsum, float(n * hw), gamma, beta)

    vmem2 = _vmem_limit(8 * (c_in + c_out) * thw + 4 * c_out * (c_in + 1))
    return pl.pallas_call(
        conv_bn_relu_kernel,
        out_shape=jax.ShapeDtypeStruct((n, c_out, hw), jnp.float32),
        grid_spec=pltpu.PrefetchScalarGridSpec(
            num_scalar_prefetch=0,
            grid=(n, t),
            in_specs=[
                pl.BlockSpec((1, c_in, thw), lambda ni, i: (ni, 0, i)),
                pl.BlockSpec((c_out, c_in), lambda ni, i: (0, 0)),
                pl.BlockSpec((c_out, 1), lambda ni, i: (0, 0)),
            ],
            out_specs=pl.BlockSpec((1, c_out, thw), lambda ni, i: (ni, 0, i))),
        compiler_params=pltpu.CompilerParams(
            dimension_semantics=("parallel", "parallel"),
            vmem_limit_bytes=vmem2),
    )(x3, w2, b2)


def _decode_upsample(x3, w, gamma, beta, h, wdt):
    """upsample=True: conv the SMALL x (1x1 conv commutes with bilinear upsample), derive
    BN stats of the upsampled conv output analytically, then fuse affine + x2 upsample + ReLU."""
    n, c_in, hw = x3.shape
    c_out = w.shape[0]
    thw = _choose_thw(hw, c_in, c_out)
    t = hw // thw

    # Pass U1: z = W @ x on the small spatial grid (bias dropped: cancels through BN).
    z = pl.pallas_call(
        conv_kernel,
        out_shape=jax.ShapeDtypeStruct((n, c_out, hw), jnp.float32),
        grid_spec=pltpu.PrefetchScalarGridSpec(
            num_scalar_prefetch=0,
            grid=(n, t),
            in_specs=[
                pl.BlockSpec((1, c_in, thw), lambda ni, i: (ni, 0, i)),
                pl.BlockSpec((c_out, c_in), lambda ni, i: (0, 0)),
            ],
            out_specs=pl.BlockSpec((1, c_out, thw), lambda ni, i: (ni, 0, i))),
        compiler_params=pltpu.CompilerParams(
            dimension_semantics=("parallel", "parallel"),
            vmem_limit_bytes=_vmem_limit(8 * (c_in + c_out) * thw + 4 * c_out * c_in)),
    )(x3, w)

    # BN statistics of the UPSAMPLED conv output, computed analytically from the small z
    # (the 4x-larger upsampled tensor is never materialized as an input):
    #   sum  = sum_hw z * (colsum(Ah) x colsum(Aw))
    #   sumsq = sum_n tr(Z^T (Ah^T Ah) Z (Aw^T Aw))
    ah_mat = _bilinear_matrix(h, 2 * h)          # (2H, H), align_corners=True
    aw_mat = _bilinear_matrix(wdt, 2 * wdt)      # (2W, W)
    z4 = z.reshape(n, c_out, h, wdt)
    sum_up = jnp.einsum('nchw,h,w->c', z4, jnp.sum(ah_mat, axis=0), jnp.sum(aw_mat, axis=0))
    gh = ah_mat.T @ ah_mat
    gw = aw_mat.T @ aw_mat
    tq = jnp.einsum('hk,nckw->nchw', gh, z4)
    tq = jnp.einsum('nchw,wv->nchv', tq, gw)
    sumsq_up = jnp.einsum('nchw,nchw->c', z4, tq)
    m_up = float(n * 4 * hw)
    mean = sum_up / m_up
    var = jnp.maximum(sumsq_up / m_up - mean * mean, 0.0)
    scale_c = gamma * lax.rsqrt(var + EPS)
    shift_c = beta - mean * scale_c

    out_hw = 4 * hw
    kron_bytes = 16 * hw * hw
    est = kron_bytes + 8 * c_out * hw + 8 * c_out * out_hw + (2 << 20)
    if kron_bytes <= (8 << 20) and est <= (44 << 20):
        # Pass U2: fused affine -> bilinear x2 -> ReLU, one resident Kronecker operator.
        kmat = jnp.kron(ah_mat, aw_mat).T.astype(jnp.float32)       # (HW, 4HW)
        out = pl.pallas_call(
            upsample_affine_relu_kernel,
            out_shape=jax.ShapeDtypeStruct((n, c_out, out_hw), jnp.float32),
            grid_spec=pltpu.PrefetchScalarGridSpec(
                num_scalar_prefetch=0,
                grid=(n,),
                in_specs=[
                    pl.BlockSpec((1, c_out, hw), lambda ni: (ni, 0, 0)),
                    pl.BlockSpec((hw, out_hw), lambda ni: (0, 0)),
                    pl.BlockSpec((c_out, 1), lambda ni: (0, 0)),
                    pl.BlockSpec((c_out, 1), lambda ni: (0, 0)),
                ],
                out_specs=pl.BlockSpec((1, c_out, out_hw), lambda ni: (ni, 0, 0))),
            compiler_params=pltpu.CompilerParams(
                dimension_semantics=("parallel",),
                vmem_limit_bytes=_vmem_limit(est)),
        )(z, kmat, scale_c[:, None], shift_c[:, None])
        return out.reshape(n, c_out, 2 * h, 2 * wdt)

    # TODO(synk): replace this plain-JAX fallback (very large H*W, Kronecker operator does not
    # fit VMEM) with an in-kernel separable (Ah @ z @ Aw^T) upsample pass.
    zs = scale_c[None, :, None, None] * z4 + shift_c[None, :, None, None]
    up = jnp.einsum('oh,nchw->ncow', ah_mat, zs)
    up = jnp.einsum('ncow,pw->ncop', up, aw_mat)
    return jnp.maximum(up, 0.0)


def decode_forward(x, params, upsample=False, force_tiled=False):
    """x: (N, Cin, H, W) float32.  Returns (N, Cout, H', W') matching the PyTorch module."""
    x = x.astype(jnp.float32)
    n, c_in, h, wdt = x.shape
    c_out = params["conv_w"].shape[0]
    w = params["conv_w"].reshape(c_out, c_in).astype(jnp.float32)
    gamma = params["bn_gamma"].astype(jnp.float32)
    beta = params["bn_beta"].astype(jnp.float32)
    # NCHW -> (N, Cin, H*W): zero-copy view (no transpose / no pad); pixels stay lane-dense.
    x3 = x.reshape(n, c_in, h * wdt)
    # Conv bias is dropped: it cancels exactly through training-mode (batch-stats) BN.

    if upsample:
        return _decode_upsample(x3, w, gamma, beta, h, wdt)

    hw = h * wdt
    if not force_tiled and 4 * n * (c_in + c_out) * hw <= (8 << 20):
        out = _decode_plain_fused(x3, w, gamma, beta)       # x read from HBM exactly once
    else:
        out = _decode_plain_tiled(x3, w, gamma, beta)
    return out.reshape(n, c_out, h, wdt)


# ------------------------- pure-JAX reference -------------------------

def _upsample_bilinear_x2_ref(x):
    n, c, h, wdt = x.shape
    ah = _bilinear_matrix(h, 2 * h)
    aw = _bilinear_matrix(wdt, 2 * wdt)
    x = jnp.einsum('oh,nchw->ncow', ah, x)
    return jnp.einsum('ncow,pw->ncop', x, aw)


def ref_forward(x, params, upsample=False):
    if upsample:
        x = _upsample_bilinear_x2_ref(x)
    c_out = params["conv_w"].shape[0]
    w = params["conv_w"].reshape(c_out, -1)
    y = jnp.einsum('nchw,oc->nohw', x, w) + params["conv_b"][None, :, None, None]
    mean = jnp.mean(y, axis=(0, 2, 3), keepdims=True)
    var = jnp.mean((y - mean) ** 2, axis=(0, 2, 3), keepdims=True)   # biased (training BN)
    yn = (y - mean) / jnp.sqrt(var + EPS)
    yn = yn * params["bn_gamma"][None, :, None, None] + params["bn_beta"][None, :, None, None]
    return jnp.maximum(yn, 0.0)


# ------------------------- parameter init (deterministic) -------------------------

def init_params(key, inplanes, planes):
    k1, k2, k3 = jax.random.split(key, 3)
    # xavier_normal_ on Conv2d(inplanes, planes, 1, 1): fan_in=inplanes, fan_out=planes
    std = float(np.sqrt(2.0 / (inplanes + planes)))
    conv_w = std * jax.random.normal(k1, (planes, inplanes, 1, 1), jnp.float32)
    bound = 1.0 / float(np.sqrt(inplanes))
    conv_b = jax.random.uniform(k2, (planes,), jnp.float32, -bound, bound)
    bn_gamma = 1.0 + 0.02 * jax.random.normal(k3, (planes,), jnp.float32)
    bn_beta = jnp.zeros((planes,), jnp.float32)
    return {"conv_w": conv_w, "conv_b": conv_b, "bn_gamma": bn_gamma, "bn_beta": bn_beta}


# ------------------------- main -------------------------

if __name__ == "__main__":
    key = jax.random.PRNGKey(0)
    kx, kp = jax.random.split(key)

    N, Cin, H, W = 2, 4, 16, 16
    Cout = 8
    x = jax.random.normal(kx, (N, Cin, H, W), jnp.float32)
    params = init_params(kp, Cin, Cout)

    ref = ref_forward(x, params, upsample=False)

    # 1) upsample=False, whole problem VMEM-resident -> single fused pallas_call (x read once).
    out = jax.block_until_ready(decode_forward(x, params, upsample=False))
    np.testing.assert_allclose(np.asarray(out), np.asarray(ref), rtol=1e-4, atol=1e-4)

    # 2) upsample=False, force the tiled two-pass path (Gram stats + fused conv/BN/ReLU).
    out_t = jax.block_until_ready(decode_forward(x, params, upsample=False, force_tiled=True))
    np.testing.assert_allclose(np.asarray(out_t), np.asarray(ref), rtol=1e-4, atol=1e-4)

    # 3) upsample=True: conv on the small grid + fused affine/bilinear-x2/ReLU kernel.
    out_u = jax.block_until_ready(decode_forward(x, params, upsample=True))
    ref_u = ref_forward(x, params, upsample=True)
    np.testing.assert_allclose(np.asarray(out_u), np.asarray(ref_u), rtol=1e-4, atol=1e-4)

    print("KERNEL_OK")
</pallas_src>

<mosaic_0001>
module attributes {stable_mosaic.version = 11 : i64} {
  func.func @fused_small_kernel(%arg0: i32, %arg1: memref<2x4x256xf32, #tpu.memory_space<vmem>>, %arg2: memref<8x4xf32, #tpu.memory_space<vmem>>, %arg3: memref<8x1xf32, #tpu.memory_space<vmem>>, %arg4: memref<8x1xf32, #tpu.memory_space<vmem>>, %arg5: memref<2x8x256xf32, #tpu.memory_space<vmem>>) attributes {dimension_semantics = [#tpu.dimension_semantics<arbitrary>], iteration_bounds = array<i64: 1>, scalar_prefetch = 0 : i64, scratch_operands = 0 : i64, tpu.core_type = #tpu.core_type<tc>, window_params = [{pipeline_mode = #tpu.pipeline_mode<synchronous>, transform_indices = @transform_0, window_bounds = array<i64: 2, 4, 256>}, {pipeline_mode = #tpu.pipeline_mode<synchronous>, transform_indices = @transform_1, window_bounds = array<i64: 8, 4>}, {pipeline_mode = #tpu.pipeline_mode<synchronous>, transform_indices = @transform_2, window_bounds = array<i64: 8, 1>}, {pipeline_mode = #tpu.pipeline_mode<synchronous>, transform_indices = @transform_3, window_bounds = array<i64: 8, 1>}, {pipeline_mode = #tpu.pipeline_mode<synchronous>, transform_indices = @transform_4, window_bounds = array<i64: 2, 8, 256>}]} {
    %c0 = arith.constant 0 : index
    %c0_0 = arith.constant 0 : index
    %0 = vector.load %arg2[%c0, %c0_0] : memref<8x4xf32, #tpu.memory_space<vmem>>, vector<8x4xf32>
    %cst = arith.constant 0.000000e+00 : f32
    %1 = vector.broadcast %cst : f32 to vector<4x4xf32>
    %cst_1 = arith.constant 0.000000e+00 : f32
    %2 = vector.broadcast %cst_1 : f32 to vector<4x1xf32>
    %c0_i32 = arith.constant 0 : i32
    %c2_i32 = arith.constant 2 : i32
    %3 = arith.addi %c0_i32, %c2_i32 : i32
    %c1_i32 = arith.constant 1 : i32
    %4:2 = scf.for %arg6 = %c0_i32 to %3 step %c1_i32 iter_args(%arg7 = %1, %arg8 = %2) -> (vector<4x4xf32>, vector<4x1xf32>)  : i32 {
      %29 = arith.index_cast %arg6 : i32 to index
      %c0_18 = arith.constant 0 : index
      %c0_19 = arith.constant 0 : index
      %30 = vector.load %arg1[%29, %c0_18, %c0_19] : memref<2x4x256xf32, #tpu.memory_space<vmem>>, vector<1x4x256xf32>
      %31 = vector.shape_cast %30 : vector<1x4x256xf32> to vector<4x256xf32>
      %cst_20 = arith.constant dense<0.000000e+00> : vector<4x4xf32>
      %32 = tpu.matmul %31, %31, %cst_20 {dimension_numbers = #tpu.dot_dimension_numbers<[1], [1], [0], [0], [0, 0, 1, 0], [], []>} : vector<4x256xf32>, vector<4x256xf32>, vector<4x4xf32> -> vector<4x4xf32>
      %33 = arith.addf %arg7, %32 : vector<4x4xf32>
      %cst_21 = arith.constant dense<0.000000e+00> : vector<4xf32>
      %34 = vector.multi_reduction <add>, %31, %cst_21 [1] : vector<4x256xf32> to vector<4xf32>
      %35 = vector.shape_cast %34 : vector<4xf32> to vector<4x1xf32>
      %36 = arith.addf %arg8, %35 : vector<4x1xf32>
      scf.yield %33, %36 : vector<4x4xf32>, vector<4x1xf32>
    }
    %c2_i32_2 = arith.constant 2 : i32
    %cst_3 = arith.constant dense<0.000000e+00> : vector<8x1xf32>
    %5 = tpu.matmul %0, %4#1, %cst_3 {dimension_numbers = #tpu.dot_dimension_numbers<[1], [0], [0], [1], [0, 0, 1, 1], [], []>} : vector<8x4xf32>, vector<4x1xf32>, vector<8x1xf32> -> vector<8x1xf32>
    %cst_4 = arith.constant 5.120000e+02 : f32
    %6 = vector.broadcast %cst_4 : f32 to vector<8x1xf32>
    %7 = arith.divf %5, %6 : vector<8x1xf32>
    %cst_5 = arith.constant dense<0.000000e+00> : vector<8x4xf32>
    %8 = tpu.matmul %0, %4#0, %cst_5 {dimension_numbers = #tpu.dot_dimension_numbers<[1], [0], [0], [1], [0, 0, 1, 1], [], []>} : vector<8x4xf32>, vector<4x4xf32>, vector<8x4xf32> -> vector<8x4xf32>
    %9 = arith.mulf %8, %0 : vector<8x4xf32>
    %cst_6 = arith.constant dense<0.000000e+00> : vector<8xf32>
    %10 = vector.multi_reduction <add>, %9, %cst_6 [1] : vector<8x4xf32> to vector<8xf32>
    %11 = vector.shape_cast %10 : vector<8xf32> to vector<8x1xf32>
    %cst_7 = arith.constant 5.120000e+02 : f32
    %12 = vector.broadcast %cst_7 : f32 to vector<8x1xf32>
    %13 = arith.divf %11, %12 : vector<8x1xf32>
    %14 = arith.mulf %7, %7 : vector<8x1xf32>
    %15 = arith.subf %13, %14 : vector<8x1xf32>
    %cst_8 = arith.constant 0.000000e+00 : f32
    %16 = vector.broadcast %cst_8 : f32 to vector<8x1xf32>
    %17 = arith.maximumf %15, %16 : vector<8x1xf32>
    %c0_9 = arith.constant 0 : index
    %c0_10 = arith.constant 0 : index
    %18 = vector.load %arg3[%c0_9, %c0_10] : memref<8x1xf32, #tpu.memory_space<vmem>>, vector<8x1xf32>
    %cst_11 = arith.constant 9.99999974E-6 : f32
    %19 = vector.broadcast %cst_11 : f32 to vector<8x1xf32>
    %20 = arith.addf %17, %19 : vector<8x1xf32>
    %21 = math.rsqrt %20 : vector<8x1xf32>
    %22 = arith.mulf %18, %21 : vector<8x1xf32>
    %23 = vector.broadcast %22 : vector<8x1xf32> to vector<8x4xf32>
    %24 = arith.mulf %23, %0 : vector<8x4xf32>
    %c0_12 = arith.constant 0 : index
    %c0_13 = arith.constant 0 : index
    %25 = vector.load %arg4[%c0_12, %c0_13] : memref<8x1xf32, #tpu.memory_space<vmem>>, vector<8x1xf32>
    %26 = arith.mulf %7, %22 : vector<8x1xf32>
    %27 = arith.subf %25, %26 : vector<8x1xf32>
    %c0_i32_14 = arith.constant 0 : i32
    %c2_i32_15 = arith.constant 2 : i32
    %28 = arith.addi %c0_i32_14, %c2_i32_15 : i32
    %c1_i32_16 = arith.constant 1 : i32
    scf.for %arg6 = %c0_i32_14 to %28 step %c1_i32_16  : i32 {
      %c1_i32_18 = arith.constant 1 : i32
      %29 = arith.muli %arg6, %c1_i32_18 : i32
      %c0_i32_19 = arith.constant 0 : i32
      %30 = arith.addi %c0_i32_19, %29 : i32
      %31 = arith.index_cast %30 : i32 to index
      %c0_20 = arith.constant 0 : index
      %c0_21 = arith.constant 0 : index
      %32 = vector.load %arg1[%31, %c0_20, %c0_21] : memref<2x4x256xf32, #tpu.memory_space<vmem>>, vector<1x4x256xf32>
      %33 = vector.shape_cast %32 : vector<1x4x256xf32> to vector<4x256xf32>
      %cst_22 = arith.constant dense<0.000000e+00> : vector<8x256xf32>
      %34 = tpu.matmul %24, %33, %cst_22 {dimension_numbers = #tpu.dot_dimension_numbers<[1], [0], [0], [1], [0, 0, 1, 1], [], []>} : vector<8x4xf32>, vector<4x256xf32>, vector<8x256xf32> -> vector<8x256xf32>
      %35 = vector.broadcast %27 : vector<8x1xf32> to vector<8x256xf32>
      %36 = arith.addf %34, %35 : vector<8x256xf32>
      %cst_23 = arith.constant 0.000000e+00 : f32
      %37 = vector.broadcast %cst_23 : f32 to vector<8x256xf32>
      %38 = arith.maximumf %36, %37 : vector<8x256xf32>
      %39 = arith.index_cast %30 : i32 to index
      %c0_24 = arith.constant 0 : index
      %c0_25 = arith.constant 0 : index
      %40 = vector.load %arg5[%39, %c0_24, %c0_25] : memref<2x8x256xf32, #tpu.memory_space<vmem>>, vector<1x8x256xf32>
      %41 = vector.shape_cast %40 : vector<1x8x256xf32> to vector<8x256xf32>
      %42 = vector.shape_cast %38 : vector<8x256xf32> to vector<1x8x256xf32>
      tpu.vector_store %arg5[%39, %c0_24, %c0_25], %42 {strides = array<i32>} : memref<2x8x256xf32, #tpu.memory_space<vmem>>, vector<1x8x256xf32>,
    }
    %c2_i32_17 = arith.constant 2 : i32
    return
  }
  func.func @transform_0(%arg0: i32) -> (i32, i32, i32) {
    %c0_i32 = arith.constant 0 : i32
    %c0_i32_0 = arith.constant 0 : i32
    %c0_i32_1 = arith.constant 0 : i32
    %c0_i32_2 = arith.constant 0 : i32
    return %c0_i32, %c0_i32_0, %c0_i32_1 : i32, i32, i32
  }
  func.func @transform_1(%arg0: i32) -> (i32, i32) {
    %c0_i32 = arith.constant 0 : i32
    %c0_i32_0 = arith.constant 0 : i32
    %c0_i32_1 = arith.constant 0 : i32
    return %c0_i32, %c0_i32_0 : i32, i32
  }
  func.func @transform_2(%arg0: i32) -> (i32, i32) {
    %c0_i32 = arith.constant 0 : i32
    %c0_i32_0 = arith.constant 0 : i32
    %c0_i32_1 = arith.constant 0 : i32
    return %c0_i32, %c0_i32_0 : i32, i32
  }
  func.func @transform_3(%arg0: i32) -> (i32, i32) {
    %c0_i32 = arith.constant 0 : i32
    %c0_i32_0 = arith.constant 0 : i32
    %c0_i32_1 = arith.constant 0 : i32
    return %c0_i32, %c0_i32_0 : i32, i32
  }
  func.func @transform_4(%arg0: i32) -> (i32, i32, i32) {
    %c0_i32 = arith.constant 0 : i32
    %c0_i32_0 = arith.constant 0 : i32
    %c0_i32_1 = arith.constant 0 : i32
    %c0_i32_2 = arith.constant 0 : i32
    return %c0_i32, %c0_i32_0, %c0_i32_1 : i32, i32, i32
  }
}

</mosaic_0001>

<llo_original>
// kernel: tpu_custom_call.1
$region0: #{tpu_custom_call.1}
  #allocation0 [shape = 'u32[]', space=smem, size = 0x4, offset = 0x4, fixed_abs, tag = 'smem constant byte address 0x4 - core index']
  #allocation1 [shape = 'u32[144,128]{1,0:T(1,128)}', space=vmem, size = 0x12000, scoped, tag = 'internal scratch']
  %s0 = inlined_call_operand.vmem [shape: f32[2,4,256], index: 0, kind: input, shape index: {}]
  %s1 = inlined_call_operand.vmem [shape: f32[8,4], index: 1, kind: input, shape index: {}]
  %s2 = inlined_call_operand.vmem [shape: f32[8,1], index: 2, kind: input, shape index: {}]
  %s3 = inlined_call_operand.vmem [shape: f32[8,1], index: 3, kind: input, shape index: {}]
  %s4 = inlined_call_operand.hbm [shape: f32[2,8,256], index: 4, kind: output, shape index: {}]
  %s5 = sld [smem:[#allocation0]]
  $region40: #{tpu_custom_call.1} parent=0
    _
  %s7 = ssub.s32 1, %s5
  %s8 = scalar_select 0, %s7, %s5
  $region1: #{tpu_custom_call.1} parent=0
    #allocation2 [shape = 'u8[16384]{0}', space=vmem, size = 0x4000, scoped, tag = 'output window, operand 0, single buffered']
    #allocation3 [shape = 's32[1]{0}', space=sflag, size = 0x4, scoped, tag = 'scoped memory for tpu_custom_call.1']
    %9 = vsyncpa [#allocation3], 0
    // Predicated region
    $region2: #{tpu_custom_call.1} parent=1 // pred_check
      _
    $region3: #{tpu_custom_call.1} parent=1 // pred_check_branch
      %11 = sbr.rel (0) target = $region5
    $region4: #{tpu_custom_call.1} parent=1 // pred_region
      _
    $region5: #{tpu_custom_call.1} parent=1 // pred_fallthru
      _
    // Predicated region
    $region6: #{tpu_custom_call.1} parent=1 // pred_check
      _
    $region7: #{tpu_custom_call.1} parent=1 // pred_check_branch
      %13 = sbr.rel (0) target = $region9
    $region8: #{tpu_custom_call.1} parent=1 // pred_region
      _
    $region9: #{tpu_custom_call.1} parent=1 // pred_fallthru
      _
    // Predicated region
    $region10: #{tpu_custom_call.1} parent=1 // pred_check
      _
    $region11: #{tpu_custom_call.1} parent=1 // pred_check_branch
      %15 = sbr.rel (0) target = $region13
    $region12: #{tpu_custom_call.1} parent=1 // pred_region
      _
    $region13: #{tpu_custom_call.1} parent=1 // pred_fallthru
      _
    // Predicated region
    $region14: #{tpu_custom_call.1} parent=1 // pred_check
      _
    $region15: #{tpu_custom_call.1} parent=1 // pred_check_branch
      %17 = sbr.rel (0) target = $region17
    $region16: #{tpu_custom_call.1} parent=1 // pred_region
      _
    $region17: #{tpu_custom_call.1} parent=1 // pred_fallthru
      _
    %v18 = vld [vmem:[%s1] sm:$0xff]
    loop: start=0, step=1, limit=2
    $region18: #{tpu_custom_call.1} parent=1 // loop_pre_header
      _
    $region19: #{tpu_custom_call.1} parent=1 // loop_header
      %s20 = sphi 0, %s24
      %p21 = scmp.ge.s32.totalorder %s20, 2
      %v25 = vphi 0.0, %v104
      %v26 = vphi 0.0, %v111
    $region20: #{tpu_custom_call.1} parent=1 // loop_header_branch
      %23 = sbr.rel (%p21) target = $region24
    $region21: #{tpu_custom_call.1} parent=1 // loop_body
      %s27 = smul.u32 %s20, 2
      %s28 = smul.addr %s27, 4
      %s29 = scalar_lea.vmem %s0, %s28
      %v30 = vld [vmem:[%s29] sm:$0xff]
      %v32 = vcombine.high %v30, %v30
      %34 = vmatprep.subr.mxu0 0.0
      %35 = vmatpush1.xpose.msra.mxu0 0.0
      %36 = vmatprep.subr.mxu0 0.0
      %37 = vmatpush1.xpose.msra.mxu0 0.0
      %38 = vmatprep.subr.mxu0 0.0
      %39 = vmatpush1.xpose.msra.mxu0 0.0
      %40 = vmatprep.subr.mxu0 0.0
      %41 = vmatpush1.xpose.msra.mxu0 0.0
      %42 = vmatprep.subr.mxu0 0.0
      %43 = vmatpush1.xpose.msra.mxu0 0.0
      %44 = vmatprep.subr.mxu0 0.0
      %45 = vmatpush1.xpose.msra.mxu0 0.0
      %46 = vmatprep.subr.mxu0 0.0
      %47 = vmatpush1.xpose.msra.mxu0 0.0
      %48 = vmatprep.subr.mxu0 0.0
      %49 = vmatpush1.xpose.msra.mxu0 0.0
      %50 = vmatprep.subr.mxu0 0.0
      %51 = vmatpush1.xpose.msra.mxu0 0.0
      %52 = vmatprep.subr.mxu0 0.0
      %53 = vmatpush1.xpose.msra.mxu0 0.0
      %54 = vmatprep.subr.mxu0 0.0
      %55 = vmatpush1.xpose.msra.mxu0 0.0
      %56 = vmatprep.subr.mxu0 0.0
      %57 = vmatpush1.xpose.msra.mxu0 0.0
      %58 = vmatprep.subr.mxu0 0.0
      %59 = vmatpush1.xpose.msra.mxu0 0.0
      %60 = vmatprep.subr.mxu0 0.0
      %61 = vmatpush1.xpose.msra.mxu0 0.0
      %62 = vmatprep.subr.mxu0 0.0
      %63 = vmatpush1.xpose.msra.mxu0 0.0
      %64 = vmatprep.subr.mxu0 %v32
      %65 = vmatpush1.xpose.msra.mxu0 %v30
      %66 = vmatprep.subr.mxu0 0.0
      %67 = vmatpush2.xpose.msra.mxu0 0.0
      %68 = vmatprep.subr.mxu0 0.0
      %69 = vmatpush2.xpose.msra.mxu0 0.0
      %70 = vmatprep.subr.mxu0 0.0
      %71 = vmatpush2.xpose.msra.mxu0 0.0
      %72 = vmatprep.subr.mxu0 0.0
      %73 = vmatpush2.xpose.msra.mxu0 0.0
      %74 = vmatprep.subr.mxu0 0.0
      %75 = vmatpush2.xpose.msra.mxu0 0.0
      %76 = vmatprep.subr.mxu0 0.0
      %77 = vmatpush2.xpose.msra.mxu0 0.0
      %78 = vmatprep.subr.mxu0 0.0
      %79 = vmatpush2.xpose.msra.mxu0 0.0
      %80 = vmatprep.subr.mxu0 0.0
      %81 = vmatpush2.xpose.msra.mxu0 0.0
      %82 = vmatprep.subr.mxu0 0.0
      %83 = vmatpush2.xpose.msra.mxu0 0.0
      %84 = vmatprep.subr.mxu0 0.0
      %85 = vmatpush2.xpose.msra.mxu0 0.0
      %86 = vmatprep.subr.mxu0 0.0
      %87 = vmatpush2.xpose.msra.mxu0 0.0
      %88 = vmatprep.subr.mxu0 0.0
      %89 = vmatpush2.xpose.msra.mxu0 0.0
      %90 = vmatprep.subr.mxu0 0.0
      %91 = vmatpush2.xpose.msra.mxu0 0.0
      %92 = vmatprep.subr.mxu0 0.0
      %93 = vmatpush2.xpose.msra.mxu0 0.0
      %94 = vmatprep.subr.mxu0 0.0
      %95 = vmatpush2.xpose.msra.mxu0 0.0
      %96 = vmatprep.subr.mxu0 0.0
      %97 = vmatpush2.xpose.msra.mxu0 0.0
      %98 = vmatprep.mubr.f32.mxu0 %v32
      %99 = vmatmul.mubr.f32.gmra.mxu0 %v30
      %v100 = vpop.f32.mrf.mxu0
      %v101 = vadd.f32 0.0, %v100
      %v102 = vpop.f32.mrf.mxu0
      %103 = vdwg.mxu0
      %v104 = vadd.f32 %v25, %v101
      %vm105 = vcmask 1043456
      %v106 = vsel %vm105, %v30, 0.0
      %v107 = vsel %vm105, %v32, 0.0
      %v108 = vadd.f32 %v106, %v107
      %109 = vadd.xlane.f32.xlu0 %v108
      %v110 = vpop.xlane.xlu0 %109
      %v111 = vadd.f32 %v26, %v110
    $region22: #{tpu_custom_call.1} parent=1 // loop_footer
      %s24 = sadd.s32 1, %s20
    $region23: #{tpu_custom_call.1} parent=1 // loop_footer_branch
      %19 = sbr.rel target = $region19
    $region24: #{tpu_custom_call.1} parent=1 // loop_exit
      _
    %vm112 = vcmask 31744
    %v114 = vsel %vm112, %v18, 0
    %vm116 = vcmask 1043456
    %v118 = vsel %vm116, %v26, 0
    %120 = vmatprep.subr.mxu0 0.0
    %121 = vmatpush1.msra.mxu0 0.0
    %122 = vmatprep.subr.mxu0 0.0
    %123 = vmatpush1.msra.mxu0 0.0
    %124 = vmatprep.subr.mxu0 0.0
    %125 = vmatpush1.msra.mxu0 0.0
    %126 = vmatprep.subr.mxu0 0.0
    %127 = vmatpush1.msra.mxu0 0.0
    %128 = vmatprep.subr.mxu0 0.0
    %129 = vmatpush1.msra.mxu0 0.0
    %130 = vmatprep.subr.mxu0 0.0
    %131 = vmatpush1.msra.mxu0 0.0
    %132 = vmatprep.subr.mxu0 0.0
    %133 = vmatpush1.msra.mxu0 0.0
    %134 = vmatprep.subr.mxu0 0.0
    %135 = vmatpush1.msra.mxu0 0.0
    %136 = vmatprep.subr.mxu0 0.0
    %137 = vmatpush1.msra.mxu0 0.0
    %138 = vmatprep.subr.mxu0 0.0
    %139 = vmatpush1.msra.mxu0 0.0
    %140 = vmatprep.subr.mxu0 0.0
    %141 = vmatpush1.msra.mxu0 0.0
    %142 = vmatprep.subr.mxu0 0.0
    %143 = vmatpush1.msra.mxu0 0.0
    %144 = vmatprep.subr.mxu0 0.0
    %145 = vmatpush1.msra.mxu0 0.0
    %146 = vmatprep.subr.mxu0 0.0
    %147 = vmatpush1.msra.mxu0 0.0
    %148 = vmatprep.subr.mxu0 0.0
    %149 = vmatpush1.msra.mxu0 0.0
    %150 = vmatprep.subr.mxu0 0.0
    %151 = vmatpush1.msra.mxu0 %v118
    %152 = vmatprep.subr.mxu0 0.0
    %153 = vmatpush2.msra.mxu0 0.0
    %154 = vmatprep.subr.mxu0 0.0
    %155 = vmatpush2.msra.mxu0 0.0
    %156 = vmatprep.subr.mxu0 0.0
    %157 = vmatpush2.msra.mxu0 0.0
    %158 = vmatprep.subr.mxu0 0.0
    %159 = vmatpush2.msra.mxu0 0.0
    %160 = vmatprep.subr.mxu0 0.0
    %161 = vmatpush2.msra.mxu0 0.0
    %162 = vmatprep.subr.mxu0 0.0
    %163 = vmatpush2.msra.mxu0 0.0
    %164 = vmatprep.subr.mxu0 0.0
    %165 = vmatpush2.msra.mxu0 0.0
    %166 = vmatprep.subr.mxu0 0.0
    %167 = vmatpush2.msra.mxu0 0.0
    %168 = vmatprep.subr.mxu0 0.0
    %169 = vmatpush2.msra.mxu0 0.0
    %170 = vmatprep.subr.mxu0 0.0
    %171 = vmatpush2.msra.mxu0 0.0
    %172 = vmatprep.subr.mxu0 0.0
    %173 = vmatpush2.msra.mxu0 0.0
    %174 = vmatprep.subr.mxu0 0.0
    %175 = vmatpush2.msra.mxu0 0.0
    %176 = vmatprep.subr.mxu0 0.0
    %177 = vmatpush2.msra.mxu0 0.0
    %178 = vmatprep.subr.mxu0 0.0
    %179 = vmatpush2.msra.mxu0 0.0
    %180 = vmatprep.subr.mxu0 0.0
    %181 = vmatpush2.msra.mxu0 0.0
    %182 = vmatprep.subr.mxu0 0.0
    %183 = vmatpush2.msra.mxu0 0.0
    %184 = vmatprep.mubr.f32.mxu0 0.0
    %185 = vmatmul.mubr.f32.gmra.mxu0 %v114
    %v186 = vpop.f32.mrf.mxu0
    %v187 = vadd.f32 0.0, %v186
    %v188 = vpop.f32.mrf.mxu0
    %189 = vdwg.mxu0
    %v190 = vrcp.pop 512.0
    %v191 = vmul.f32 %v187, %v190
    %v193 = vsel %vm116, %v25, 0
    %195 = vmatprep.subr.mxu0 0.0
    %196 = vmatpush1.msra.mxu0 0.0
    %197 = vmatprep.subr.mxu0 0.0
    %198 = vmatpush1.msra.mxu0 0.0
    %199 = vmatprep.subr.mxu0 0.0
    %200 = vmatpush1.msra.mxu0 0.0
    %201 = vmatprep.subr.mxu0 0.0
    %202 = vmatpush1.msra.mxu0 0.0
    %203 = vmatprep.subr.mxu0 0.0
    %204 = vmatpush1.msra.mxu0 0.0
    %205 = vmatprep.subr.mxu0 0.0
    %206 = vmatpush1.msra.mxu0 0.0
    %207 = vmatprep.subr.mxu0 0.0
    %208 = vmatpush1.msra.mxu0 0.0
    %209 = vmatprep.subr.mxu0 0.0
    %210 = vmatpush1.msra.mxu0 0.0
    %211 = vmatprep.subr.mxu0 0.0
    %212 = vmatpush1.msra.mxu0 0.0
    %213 = vmatprep.subr.mxu0 0.0
    %214 = vmatpush1.msra.mxu0 0.0
    %215 = vmatprep.subr.mxu0 0.0
    %216 = vmatpush1.msra.mxu0 0.0
    %217 = vmatprep.subr.mxu0 0.0
    %218 = vmatpush1.msra.mxu0 0.0
    %219 = vmatprep.subr.mxu0 0.0
    %220 = vmatpush1.msra.mxu0 0.0
    %221 = vmatprep.subr.mxu0 0.0
    %222 = vmatpush1.msra.mxu0 0.0
    %223 = vmatprep.subr.mxu0 0.0
    %224 = vmatpush1.msra.mxu0 0.0
    %225 = vmatprep.subr.mxu0 0.0
    %226 = vmatpush1.msra.mxu0 %v193
    %227 = vmatprep.subr.mxu0 0.0
    %228 = vmatpush2.msra.mxu0 0.0
    %229 = vmatprep.subr.mxu0 0.0
    %230 = vmatpush2.msra.mxu0 0.0
    %231 = vmatprep.subr.mxu0 0.0
    %232 = vmatpush2.msra.mxu0 0.0
    %233 = vmatprep.subr.mxu0 0.0
    %234 = vmatpush2.msra.mxu0 0.0
    %235 = vmatprep.subr.mxu0 0.0
    %236 = vmatpush2.msra.mxu0 0.0
    %237 = vmatprep.subr.mxu0 0.0
    %238 = vmatpush2.msra.mxu0 0.0
    %239 = vmatprep.subr.mxu0 0.0
    %240 = vmatpush2.msra.mxu0 0.0
    %241 = vmatprep.subr.mxu0 0.0
    %242 = vmatpush2.msra.mxu0 0.0
    %243 = vmatprep.subr.mxu0 0.0
    %244 = vmatpush2.msra.mxu0 0.0
    %245 = vmatprep.subr.mxu0 0.0
    %246 = vmatpush2.msra.mxu0 0.0
    %247 = vmatprep.subr.mxu0 0.0
    %248 = vmatpush2.msra.mxu0 0.0
    %249 = vmatprep.subr.mxu0 0.0
    %250 = vmatpush2.msra.mxu0 0.0
    %251 = vmatprep.subr.mxu0 0.0
    %252 = vmatpush2.msra.mxu0 0.0
    %253 = vmatprep.subr.mxu0 0.0
    %254 = vmatpush2.msra.mxu0 0.0
    %255 = vmatprep.subr.mxu0 0.0
    %256 = vmatpush2.msra.mxu0 0.0
    %257 = vmatprep.subr.mxu0 0.0
    %258 = vmatpush2.msra.mxu0 0.0
    %259 = vmatprep.mubr.f32.mxu0 0.0
    %260 = vmatmul.mubr.f32.gmra.mxu0 %v114
    %v261 = vpop.f32.mrf.mxu0
    %v262 = vadd.f32 0.0, %v261
    %v263 = vpop.f32.mrf.mxu0
    %264 = vdwg.mxu0
    %v265 = vmul.f32 %v262, %v18
    %v266 = vsel %vm112, %v265, 0.0
    %267 = vadd.xlane.f32.xlu0 %v266
    %v268 = vpop.xlane.xlu0 %267
    %v269 = vmul.f32 %v268, %v190
    %v270 = vmul.f32 %v191, %v191
    %v271 = vsub.f32 %v269, %v270
    %v272 = vmax.f32 %v271, 0.0
    %v273 = vld [vmem:[%s2] sm:$0xff]
    %v274 = vadd.f32 %v272, 1e-05
    %v275 = vrsqrt.pop %v274
    %v276 = vmul.f32 %v273, %v275
    %278 = vset.pattern.permute.xlu0 0
    %279 = vperm.xlu0 %278, %v276
    %v280 = vpop.permute.xlu0 %279
    %v282 = vmul.f32 %v280, %v18
    %v283 = vld [vmem:[%s3] sm:$0xff]
    %v284 = vmul.f32 %v191, %v276
    %v285 = vsub.f32 %v283, %v284
    loop: start=0, step=1, limit=2
    $region25: #{tpu_custom_call.1} parent=1 // loop_pre_header
      _
    $region26: #{tpu_custom_call.1} parent=1 // loop_header
      %s287 = sphi 0, %s291
      %p288 = scmp.ge.s32.totalorder %s287, 2
    $region27: #{tpu_custom_call.1} parent=1 // loop_header_branch
      %290 = sbr.rel (%p288) target = $region31
    $region28: #{tpu_custom_call.1} parent=1 // loop_body
      %s292 = smul.u32 %s287, 2
      %s293 = smul.addr %s292, 4
      %s294 = scalar_lea.vmem %s0, %s293
      %v295 = vld [vmem:[%s294] sm:$0xff]
      %297 = vset.pattern.permute.xlu0 0
      %298 = vperm.xlu0 %297, %v285
      %v299 = vpop.permute.xlu0 %298
      %v302 = vcombine.high %v295, %v295
      %v304 = vsel %vm112, %v282, 0
      %v306 = vsel %vm116, %v295, 0
      %v308 = vsel %vm116, %v302, 0
      %310 = vmatprep.subr.mxu0 0.0
      %311 = vmatpush1.msra.mxu0 0.0
      %312 = vmatprep.subr.mxu0 0.0
      %313 = vmatpush1.msra.mxu0 0.0
      %314 = vmatprep.subr.mxu0 0.0
      %315 = vmatpush1.msra.mxu0 0.0
      %316 = vmatprep.subr.mxu0 0.0
      %317 = vmatpush1.msra.mxu0 0.0
      %318 = vmatprep.subr.mxu0 0.0
      %319 = vmatpush1.msra.mxu0 0.0
      %320 = vmatprep.subr.mxu0 0.0
      %321 = vmatpush1.msra.mxu0 0.0
      %322 = vmatprep.subr.mxu0 0.0
      %323 = vmatpush1.msra.mxu0 0.0
      %324 = vmatprep.subr.mxu0 0.0
      %325 = vmatpush1.msra.mxu0 0.0
      %326 = vmatprep.subr.mxu0 0.0
      %327 = vmatpush1.msra.mxu0 0.0
      %328 = vmatprep.subr.mxu0 0.0
      %329 = vmatpush1.msra.mxu0 0.0
      %330 = vmatprep.subr.mxu0 0.0
      %331 = vmatpush1.msra.mxu0 0.0
      %332 = vmatprep.subr.mxu0 0.0
      %333 = vmatpush1.msra.mxu0 0.0
      %334 = vmatprep.subr.mxu0 0.0
      %335 = vmatpush1.msra.mxu0 0.0
      %336 = vmatprep.subr.mxu0 0.0
      %337 = vmatpush1.msra.mxu0 0.0
      %338 = vmatprep.subr.mxu0 0.0
      %339 = vmatpush1.msra.mxu0 0.0
      %340 = vmatprep.subr.mxu0 %v308
      %341 = vmatpush1.msra.mxu0 %v306
      %342 = vmatprep.subr.mxu0 0.0
      %343 = vmatpush2.msra.mxu0 0.0
      %344 = vmatprep.subr.mxu0 0.0
      %345 = vmatpush2.msra.mxu0 0.0
      %346 = vmatprep.subr.mxu0 0.0
      %347 = vmatpush2.msra.mxu0 0.0
      %348 = vmatprep.subr.mxu0 0.0
      %349 = vmatpush2.msra.mxu0 0.0
      %350 = vmatprep.subr.mxu0 0.0
      %351 = vmatpush2.msra.mxu0 0.0
      %352 = vmatprep.subr.mxu0 0.0
      %353 = vmatpush2.msra.mxu0 0.0
      %354 = vmatprep.subr.mxu0 0.0
      %355 = vmatpush2.msra.mxu0 0.0
      %356 = vmatprep.subr.mxu0 0.0
      %357 = vmatpush2.msra.mxu0 0.0
      %358 = vmatprep.subr.mxu0 0.0
      %359 = vmatpush2.msra.mxu0 0.0
      %360 = vmatprep.subr.mxu0 0.0
      %361 = vmatpush2.msra.mxu0 0.0
      %362 = vmatprep.subr.mxu0 0.0
      %363 = vmatpush2.msra.mxu0 0.0
      %364 = vmatprep.subr.mxu0 0.0
      %365 = vmatpush2.msra.mxu0 0.0
      %366 = vmatprep.subr.mxu0 0.0
      %367 = vmatpush2.msra.mxu0 0.0
      %368 = vmatprep.subr.mxu0 0.0
      %369 = vmatpush2.msra.mxu0 0.0
      %370 = vmatprep.subr.mxu0 0.0
      %371 = vmatpush2.msra.mxu0 0.0
      %372 = vmatprep.subr.mxu0 0.0
      %373 = vmatpush2.msra.mxu0 0.0
      %374 = vmatprep.mubr.f32.mxu0 0.0
      %375 = vmatmul.mubr.f32.gmra.mxu0 %v304
      %v376 = vpop.f32.mrf.mxu0
      %v377 = vadd.f32 %v299, %v376
      %v378 = vpop.f32.mrf.mxu0
      %v379 = vadd.f32 %v299, %v378
      %380 = vdwg.mxu0
      %v381 = vmax.f32 %v377, 0.0
      %v382 = vmax.f32 %v379, 0.0
      %s383 = smul.addr %s292, 8
      %s384 = scalar_lea.vmem [#allocation2], %s383
      %385 = vst [vmem:[%s384] sm:$0xff] %v381
      %386 = vst [vmem:[%s384 + $0x8] sm:$0xff] %v382
    $region29: #{tpu_custom_call.1} parent=1 // loop_footer
      %s291 = sadd.s32 1, %s287
    $region30: #{tpu_custom_call.1} parent=1 // loop_footer_branch
      %286 = sbr.rel target = $region26
    $region31: #{tpu_custom_call.1} parent=1 // loop_exit
      _
    // Predicated region
    $region32: #{tpu_custom_call.1} parent=1 // pred_check
      _
    $region33: #{tpu_custom_call.1} parent=1 // pred_check_branch
      %388 = sbr.rel (0) target = $region35
    $region34: #{tpu_custom_call.1} parent=1 // pred_region
      %s390 = ssub.s32 512, 512
      %391 = vsyncadd [#allocation3], %s390
      %s392 = sshll.u32 [#allocation2], 4
      %s393 = int_to_ptr.vmem [resolvable:$true] %s392
      %398 = dma.vmem_to_hbm [thread:$0]  %s393, 512, %s4, [#allocation3], 256, 256, 16
    $region35: #{tpu_custom_call.1} parent=1 // pred_fallthru
      _
    // Predicated region
    $region36: #{tpu_custom_call.1} parent=1 // pred_check
      _
    $region37: #{tpu_custom_call.1} parent=1 // pred_check_branch
      %400 = sbr.rel (0) target = $region39
    $region38: #{tpu_custom_call.1} parent=1 // pred_region
      %401 = dma.done [#allocation3], 512
    $region39: #{tpu_custom_call.1} parent=1 // pred_fallthru
      _
    %402 = vsyncpa [#allocation3], 1

</llo_original>
